<compile_context>
chip_gen: v7x
topology: tpu7x:2x2x1
jax: 0.10.0
libtpu: 0.0.40
codegen_flags: <defaults>
</compile_context>

<pallas_src>
import jax
import jax.numpy as jnp
from jax.experimental import pallas as pl
from jax.experimental.pallas import tpu as pltpu


def _round_up(x, m):
    return (x + m - 1) // m * m


def _vmem_limit_bytes(per_buffer_tile_bytes, scratch_bytes=0):
    """Scoped-VMEM limit from the double-buffered tile footprint, 2x headroom."""
    est = 2 * per_buffer_tile_bytes + scratch_bytes
    return int(min(max(8 << 20, 2 * est), 64 << 20))


# --------------------------------------------------------------------------
# Kernel 1: encoder (K-tiled over D_in) + reparametrize + decoder hidden.
# --------------------------------------------------------------------------
def encoder_kernel(x_ref, eps_ref, we1_ref, be1_ref, wh_ref, bh_ref,
                   wd1_ref, bd1_ref, hd_ref, acc_ref):
    k = pl.program_id(1)

    @pl.when(k == 0)
    def _():
        acc_ref[...] = jnp.zeros_like(acc_ref)

    # Partial encoder matmul for this K tile (bf16 MXU, f32 accumulate).
    acc_ref[...] += jnp.dot(x_ref[...].astype(jnp.bfloat16), we1_ref[...],
                            preferred_element_type=jnp.float32)

    @pl.when(k == pl.num_programs(1) - 1)
    def _():
        z_pad = eps_ref.shape[-1]
        h = jnp.maximum(acc_ref[...] + be1_ref[...], 0.0)

        # Fused mu|logvar head: single [H1, 2*Zp] matmul, lane-aligned slices.
        head = jnp.dot(h.astype(jnp.bfloat16), wh_ref[...],
                       preferred_element_type=jnp.float32) + bh_ref[...]
        mu = head[:, :z_pad]
        logvar = head[:, z_pad:]

        # Reparametrize: z = mu + eps * exp(0.5 * logvar)
        z = mu + eps_ref[...] * jnp.exp(0.5 * logvar)

        # Decoder hidden layer (small: Zp x H1), store bf16 for kernel 2.
        hd = jnp.dot(z.astype(jnp.bfloat16), wd1_ref[...],
                     preferred_element_type=jnp.float32) + bd1_ref[...]
        hd_ref[...] = jnp.maximum(hd, 0.0).astype(hd_ref.dtype)


# --------------------------------------------------------------------------
# Kernel 2: decoder output (N-tiled over D_in) + sigmoid, bf16 writeback.
# --------------------------------------------------------------------------
def decoder_kernel(hd_ref, wd2_ref, bd2_ref, out_ref):
    logits = jnp.dot(hd_ref[...], wd2_ref[...],
                     preferred_element_type=jnp.float32) + bd2_ref[...]
    # sigmoid(x) = 0.5 * (tanh(0.5 x) + 1): one EUP op, no approx reciprocal.
    out_ref[...] = (0.5 * (jnp.tanh(0.5 * logits) + 1.0)).astype(out_ref.dtype)


# --------------------------------------------------------------------------
# One-time parameter preparation (call at model load, NOT per forward).
# --------------------------------------------------------------------------
def prepare_params(params, *, d_tile=512):
    (we1, be1, wmu, bmu, wlv, blv, wd1, bd1, wd2, bd2) = params
    d_in, h1 = we1.shape
    z = wmu.shape[1]

    td = min(d_tile, _round_up(d_in, 128))      # D tile, multiple of 128
    d_pad = _round_up(d_in, td)                 # lane-dense, divisible by td
    z_pad = _round_up(z, 128)                   # lane-aligned head slices

    def pad2(a, rows, cols):
        return jnp.pad(a, ((0, rows - a.shape[0]), (0, cols - a.shape[1])))

    we1_b = pad2(we1, d_pad, h1).astype(jnp.bfloat16)                   # [Dp, H1]
    wh_b = jnp.concatenate([pad2(wmu, h1, z_pad), pad2(wlv, h1, z_pad)],
                           axis=1).astype(jnp.bfloat16)                 # [H1, 2Zp]
    bh_f = jnp.concatenate([pad2(bmu, 1, z_pad), pad2(blv, 1, z_pad)],
                           axis=1).astype(jnp.float32)                  # [1, 2Zp]
    wd1_b = pad2(wd1, z_pad, h1).astype(jnp.bfloat16)                   # [Zp, H1]
    wd2_b = pad2(wd2, h1, d_pad).astype(jnp.bfloat16)                   # [H1, Dp]
    be1_f = be1.astype(jnp.float32)
    bd1_f = bd1.astype(jnp.float32)
    bd2_f = pad2(bd2, 1, d_pad).astype(jnp.float32)                     # [1, Dp]

    prepared = (we1_b, be1_f, wh_b, bh_f, wd1_b, bd1_f, wd2_b, bd2_f)
    meta = dict(D_in=d_in, D_pad=d_pad, H1=h1, Z=z, Z_pad=z_pad, TD=td)
    return prepared, meta


# --------------------------------------------------------------------------
# Forward wrapper.
# --------------------------------------------------------------------------
def provae_forward(x_nchw, eps, prepared, meta, *, batch_tile=128):
    (we1_b, be1_f, wh_b, bh_f, wd1_b, bd1_f, wd2_b, bd2_f) = prepared
    d_in, d_pad, h1 = meta["D_in"], meta["D_pad"], meta["H1"]
    z, z_pad, td = meta["Z"], meta["Z_pad"], meta["TD"]

    B, C, H, W = x_nchw.shape
    assert C * H * W == d_in
    assert eps.shape == (B, z)

    # Batch tile: >= 8 sublanes, <= batch_tile rows per MXU pass.
    TB = min(batch_tile, _round_up(B, 8))
    b_pad = _round_up(B, TB)

    # ---- input prep: single pad pass only when needed ----
    x_flat = x_nchw.reshape(B, d_in)
    if (b_pad, d_pad) != (B, d_in):
        # Padding pass is unavoidable -> fold the bf16 cast into it.
        x_flat = jnp.pad(x_flat.astype(jnp.bfloat16),
                         ((0, b_pad - B), (0, d_pad - d_in)))
    # else: keep f32 and cast per-tile in-kernel (single HBM read of x).

    eps_p = eps.astype(jnp.float32)
    if (b_pad, z_pad) != (B, z):
        eps_p = jnp.pad(eps_p, ((0, b_pad - B), (0, z_pad - z)))

    n_b = b_pad // TB
    n_d = d_pad // td
    x_bytes = x_flat.dtype.itemsize

    # ---- kernel 1: encoder reduction over K=D_in + reparam + dec hidden ----
    tiles1 = (TB * td * x_bytes + TB * z_pad * 4 + td * h1 * 2 + h1 * 4 +
              h1 * 2 * z_pad * 2 + 2 * z_pad * 4 + z_pad * h1 * 2 + h1 * 4 +
              TB * h1 * 2)
    vmem1 = _vmem_limit_bytes(tiles1, scratch_bytes=TB * h1 * 4)

    hd = pl.pallas_call(
        encoder_kernel,
        out_shape=jax.ShapeDtypeStruct((b_pad, h1), jnp.bfloat16),
        grid=(n_b, n_d),
        in_specs=[
            pl.BlockSpec((TB, td), lambda i, k: (i, k)),          # x tile
            pl.BlockSpec((TB, z_pad), lambda i, k: (i, 0)),       # eps tile
            pl.BlockSpec((td, h1), lambda i, k: (k, 0)),          # we1 K tile
            pl.BlockSpec((1, h1), lambda i, k: (0, 0)),           # be1
            pl.BlockSpec((h1, 2 * z_pad), lambda i, k: (0, 0)),   # wh (mu|lv)
            pl.BlockSpec((1, 2 * z_pad), lambda i, k: (0, 0)),    # bh
            pl.BlockSpec((z_pad, h1), lambda i, k: (0, 0)),       # wd1
            pl.BlockSpec((1, h1), lambda i, k: (0, 0)),           # bd1
        ],
        out_specs=pl.BlockSpec((TB, h1), lambda i, k: (i, 0)),
        scratch_shapes=[pltpu.VMEM((TB, h1), jnp.float32)],
        compiler_params=pltpu.CompilerParams(
            dimension_semantics=("parallel", "arbitrary"),
            vmem_limit_bytes=vmem1),
    )(x_flat, eps_p, we1_b, be1_f, wh_b, bh_f, wd1_b, bd1_f)

    # ---- kernel 2: decoder output, tiled over N=D_in, bf16 sigmoid out ----
    tiles2 = TB * h1 * 2 + h1 * td * 2 + td * 4 + TB * td * 2
    vmem2 = _vmem_limit_bytes(tiles2)

    out_flat = pl.pallas_call(
        decoder_kernel,
        out_shape=jax.ShapeDtypeStruct((b_pad, d_pad), jnp.bfloat16),
        grid=(n_b, n_d),
        in_specs=[
            pl.BlockSpec((TB, h1), lambda i, n: (i, 0)),          # hd tile
            pl.BlockSpec((h1, td), lambda i, n: (0, n)),          # wd2 N tile
            pl.BlockSpec((1, td), lambda i, n: (0, n)),           # bd2 N tile
        ],
        out_specs=pl.BlockSpec((TB, td), lambda i, n: (i, n)),
        compiler_params=pltpu.CompilerParams(
            dimension_semantics=("parallel", "parallel"),
            vmem_limit_bytes=vmem2),
    )(hd, wd2_b, bd2_f)

    if (b_pad, d_pad) != (B, d_in):
        out_flat = out_flat[:B, :d_in]
    return out_flat.reshape(B, C, H, W)


# --------------------------------------------------------------------------
# Parameters / pure-JAX reference.
# --------------------------------------------------------------------------
def init_params(key, d_in, h1, z):
    ks = jax.random.split(key, 6)
    scale = 0.05
    we1 = scale * jax.random.normal(ks[0], (d_in, h1), jnp.float32)
    be1 = jnp.zeros((1, h1), jnp.float32)
    wmu = scale * jax.random.normal(ks[1], (h1, z), jnp.float32)
    bmu = jnp.zeros((1, z), jnp.float32)
    wlv = scale * jax.random.normal(ks[2], (h1, z), jnp.float32)
    blv = jnp.zeros((1, z), jnp.float32)
    wd1 = scale * jax.random.normal(ks[3], (z, h1), jnp.float32)
    bd1 = jnp.zeros((1, h1), jnp.float32)
    wd2 = scale * jax.random.normal(ks[4], (h1, d_in), jnp.float32)
    bd2 = jnp.zeros((1, d_in), jnp.float32)
    return (we1, be1, wmu, bmu, wlv, blv, wd1, bd1, wd2, bd2)


def provae_reference(x_nchw, eps, params):
    """Pure-JAX f32 reference (matches the PyTorch forward)."""
    B, C, H, W = x_nchw.shape
    x = x_nchw.reshape(B, C * H * W)
    (we1, be1, wmu, bmu, wlv, blv, wd1, bd1, wd2, bd2) = params
    h = jnp.maximum(x @ we1 + be1, 0.0)
    mu = h @ wmu + bmu
    logvar = h @ wlv + blv
    z = mu + eps * jnp.exp(0.5 * logvar)
    hd = jnp.maximum(z @ wd1 + bd1, 0.0)
    out = jax.nn.sigmoid(hd @ wd2 + bd2)
    return out.reshape(B, C, H, W)


if __name__ == "__main__":
    key = jax.random.PRNGKey(0)
    k_x, k_eps, k_p = jax.random.split(key, 3)

    B, C, H, W = 2, 4, 16, 16
    D_in = C * H * W        # 1024
    H1 = 128                # encoder/decoder hidden width
    Z = 32                  # latent dim

    x = jax.random.normal(k_x, (B, C, H, W), jnp.float32)
    # eps is the reparametrization noise (deterministic via PRNGKey)
    eps = jax.random.normal(k_eps, (B, Z), jnp.float32)
    params = init_params(k_p, D_in, H1, Z)

    # One-time weight prep (bf16 cast / concat / padding) -- "model load" time.
    prepared, meta = prepare_params(params)

    out = provae_forward(x, eps, prepared, meta)
    out = jax.block_until_ready(out)

    ref = provae_reference(x, eps, params)
    assert out.shape == (B, C, H, W)
    assert out.dtype == jnp.bfloat16
    # bf16 weights/activations + bf16 output writeback -> relaxed tolerance
    err = float(jnp.max(jnp.abs(out.astype(jnp.float32) - ref)))
    assert err < 2e-2, err
    print("KERNEL_OK")
</pallas_src>

<mosaic_0001>
module attributes {stable_mosaic.version = 11 : i64} {
  func.func @encoder_kernel(%arg0: i32, %arg1: i32, %arg2: memref<8x512xbf16, #tpu.memory_space<vmem>>, %arg3: memref<8x128xf32, #tpu.memory_space<vmem>>, %arg4: memref<512x128xbf16, #tpu.memory_space<vmem>>, %arg5: memref<1x128xf32, #tpu.memory_space<vmem>>, %arg6: memref<128x256xbf16, #tpu.memory_space<vmem>>, %arg7: memref<1x256xf32, #tpu.memory_space<vmem>>, %arg8: memref<128x128xbf16, #tpu.memory_space<vmem>>, %arg9: memref<1x128xf32, #tpu.memory_space<vmem>>, %arg10: memref<8x128xbf16, #tpu.memory_space<vmem>>, %arg11: memref<8x128xf32, #tpu.memory_space<vmem>>) attributes {dimension_semantics = [#tpu.dimension_semantics<parallel>, #tpu.dimension_semantics<arbitrary>], iteration_bounds = array<i64: 1, 2>, scalar_prefetch = 0 : i64, scratch_operands = 1 : i64, tpu.core_type = #tpu.core_type<tc>, window_params = [{transform_indices = @transform_0, window_bounds = array<i64: 8, 512>}, {transform_indices = @transform_1, window_bounds = array<i64: 8, 128>}, {transform_indices = @transform_2, window_bounds = array<i64: 512, 128>}, {pipeline_mode = #tpu.pipeline_mode<synchronous>, transform_indices = @transform_3, window_bounds = array<i64: 1, 128>}, {pipeline_mode = #tpu.pipeline_mode<synchronous>, transform_indices = @transform_4, window_bounds = array<i64: 128, 256>}, {pipeline_mode = #tpu.pipeline_mode<synchronous>, transform_indices = @transform_5, window_bounds = array<i64: 1, 256>}, {pipeline_mode = #tpu.pipeline_mode<synchronous>, transform_indices = @transform_6, window_bounds = array<i64: 128, 128>}, {pipeline_mode = #tpu.pipeline_mode<synchronous>, transform_indices = @transform_7, window_bounds = array<i64: 1, 128>}, {transform_indices = @transform_8, window_bounds = array<i64: 8, 128>}]} {
    %c0_i32 = arith.constant 0 : i32
    %0 = arith.cmpi eq, %arg1, %c0_i32 : i32
    %1 = arith.extui %0 : i1 to i32
    %c0_i32_0 = arith.constant 0 : i32
    %2 = arith.cmpi ne, %1, %c0_i32_0 : i32
    scf.if %2 {
      %cst_9 = arith.constant 0.000000e+00 : f32
      %12 = vector.broadcast %cst_9 : f32 to vector<8x128xf32>
      %c0_10 = arith.constant 0 : index
      %c0_11 = arith.constant 0 : index
      %13 = vector.load %arg11[%c0_10, %c0_11] : memref<8x128xf32, #tpu.memory_space<vmem>>, vector<8x128xf32>
      tpu.vector_store %arg11[%c0_10, %c0_11], %12 {strides = array<i32>} : memref<8x128xf32, #tpu.memory_space<vmem>>, vector<8x128xf32>,
    } else {
    }
    %c0 = arith.constant 0 : index
    %c0_1 = arith.constant 0 : index
    %3 = vector.load %arg11[%c0, %c0_1] : memref<8x128xf32, #tpu.memory_space<vmem>>, vector<8x128xf32>
    %c0_2 = arith.constant 0 : index
    %c0_3 = arith.constant 0 : index
    %4 = vector.load %arg2[%c0_2, %c0_3] : memref<8x512xbf16, #tpu.memory_space<vmem>>, vector<8x512xbf16>
    %c0_4 = arith.constant 0 : index
    %c0_5 = arith.constant 0 : index
    %5 = vector.load %arg4[%c0_4, %c0_5] : memref<512x128xbf16, #tpu.memory_space<vmem>>, vector<512x128xbf16>
    %cst = arith.constant dense<0.000000e+00> : vector<8x128xf32>
    %6 = tpu.matmul %4, %5, %cst {dimension_numbers = #tpu.dot_dimension_numbers<[1], [0], [0], [1], [0, 0, 1, 1], [], []>} : vector<8x512xbf16>, vector<512x128xbf16>, vector<8x128xf32> -> vector<8x128xf32>
    %7 = arith.addf %3, %6 : vector<8x128xf32>
    %c0_6 = arith.constant 0 : index
    %c0_7 = arith.constant 0 : index
    %8 = vector.load %arg11[%c0_6, %c0_7] : memref<8x128xf32, #tpu.memory_space<vmem>>, vector<8x128xf32>
    tpu.vector_store %arg11[%c0_6, %c0_7], %7 {strides = array<i32>} : memref<8x128xf32, #tpu.memory_space<vmem>>, vector<8x128xf32>,
    %c1_i32 = arith.constant 1 : i32
    %9 = arith.cmpi eq, %arg1, %c1_i32 : i32
    %10 = arith.extui %9 : i1 to i32
    %c0_i32_8 = arith.constant 0 : i32
    %11 = arith.cmpi ne, %10, %c0_i32_8 : i32
    scf.if %11 {
      %c0_9 = arith.constant 0 : index
      %c0_10 = arith.constant 0 : index
      %12 = vector.load %arg11[%c0_9, %c0_10] : memref<8x128xf32, #tpu.memory_space<vmem>>, vector<8x128xf32>
      %c0_11 = arith.constant 0 : index
      %c0_12 = arith.constant 0 : index
      %13 = vector.load %arg5[%c0_11, %c0_12] : memref<1x128xf32, #tpu.memory_space<vmem>>, vector<1x128xf32>
      %14 = vector.broadcast %13 : vector<1x128xf32> to vector<8x128xf32>
      %15 = arith.addf %12, %14 : vector<8x128xf32>
      %cst_13 = arith.constant 0.000000e+00 : f32
      %16 = vector.broadcast %cst_13 : f32 to vector<8x128xf32>
      %17 = arith.maximumf %15, %16 : vector<8x128xf32>
      %18 = arith.truncf %17 : vector<8x128xf32> to vector<8x128xbf16>
      %c0_14 = arith.constant 0 : index
      %c0_15 = arith.constant 0 : index
      %19 = vector.load %arg6[%c0_14, %c0_15] : memref<128x256xbf16, #tpu.memory_space<vmem>>, vector<128x256xbf16>
      %cst_16 = arith.constant dense<0.000000e+00> : vector<8x256xf32>
      %20 = tpu.matmul %18, %19, %cst_16 {dimension_numbers = #tpu.dot_dimension_numbers<[1], [0], [0], [1], [0, 0, 1, 1], [], []>} : vector<8x128xbf16>, vector<128x256xbf16>, vector<8x256xf32> -> vector<8x256xf32>
      %c0_17 = arith.constant 0 : index
      %c0_18 = arith.constant 0 : index
      %21 = vector.load %arg7[%c0_17, %c0_18] : memref<1x256xf32, #tpu.memory_space<vmem>>, vector<1x256xf32>
      %22 = vector.broadcast %21 : vector<1x256xf32> to vector<8x256xf32>
      %23 = arith.addf %20, %22 : vector<8x256xf32>
      %24 = vector.extract_strided_slice %23 {offsets = [0, 0], sizes = [8, 128], strides = [1, 1]} : vector<8x256xf32> to vector<8x128xf32>
      %25 = vector.extract_strided_slice %23 {offsets = [0, 128], sizes = [8, 128], strides = [1, 1]} : vector<8x256xf32> to vector<8x128xf32>
      %c0_19 = arith.constant 0 : index
      %c0_20 = arith.constant 0 : index
      %26 = vector.load %arg3[%c0_19, %c0_20] : memref<8x128xf32, #tpu.memory_space<vmem>>, vector<8x128xf32>
      %cst_21 = arith.constant 5.000000e-01 : f32
      %27 = vector.broadcast %cst_21 : f32 to vector<8x128xf32>
      %28 = arith.mulf %27, %25 : vector<8x128xf32>
      %29 = math.exp %28 : vector<8x128xf32>
      %30 = arith.mulf %26, %29 : vector<8x128xf32>
      %31 = arith.addf %24, %30 : vector<8x128xf32>
      %32 = arith.truncf %31 : vector<8x128xf32> to vector<8x128xbf16>
      %c0_22 = arith.constant 0 : index
      %c0_23 = arith.constant 0 : index
      %33 = vector.load %arg8[%c0_22, %c0_23] : memref<128x128xbf16, #tpu.memory_space<vmem>>, vector<128x128xbf16>
      %cst_24 = arith.constant dense<0.000000e+00> : vector<8x128xf32>
      %34 = tpu.matmul %32, %33, %cst_24 {dimension_numbers = #tpu.dot_dimension_numbers<[1], [0], [0], [1], [0, 0, 1, 1], [], []>} : vector<8x128xbf16>, vector<128x128xbf16>, vector<8x128xf32> -> vector<8x128xf32>
      %c0_25 = arith.constant 0 : index
      %c0_26 = arith.constant 0 : index
      %35 = vector.load %arg9[%c0_25, %c0_26] : memref<1x128xf32, #tpu.memory_space<vmem>>, vector<1x128xf32>
      %36 = vector.broadcast %35 : vector<1x128xf32> to vector<8x128xf32>
      %37 = arith.addf %34, %36 : vector<8x128xf32>
      %cst_27 = arith.constant 0.000000e+00 : f32
      %38 = vector.broadcast %cst_27 : f32 to vector<8x128xf32>
      %39 = arith.maximumf %37, %38 : vector<8x128xf32>
      %40 = arith.truncf %39 : vector<8x128xf32> to vector<8x128xbf16>
      %c0_28 = arith.constant 0 : index
      %c0_29 = arith.constant 0 : index
      %41 = vector.load %arg10[%c0_28, %c0_29] : memref<8x128xbf16, #tpu.memory_space<vmem>>, vector<8x128xbf16>
      tpu.vector_store %arg10[%c0_28, %c0_29], %40 {strides = array<i32>} : memref<8x128xbf16, #tpu.memory_space<vmem>>, vector<8x128xbf16>,
    } else {
    }
    return
  }
  func.func @transform_0(%arg0: i32, %arg1: i32) -> (i32, i32) {
    %c0_i32 = arith.constant 0 : i32
    return %arg0, %arg1 : i32, i32
  }
  func.func @transform_1(%arg0: i32, %arg1: i32) -> (i32, i32) {
    %c0_i32 = arith.constant 0 : i32
    %c0_i32_0 = arith.constant 0 : i32
    return %arg0, %c0_i32 : i32, i32
  }
  func.func @transform_2(%arg0: i32, %arg1: i32) -> (i32, i32) {
    %c0_i32 = arith.constant 0 : i32
    %c0_i32_0 = arith.constant 0 : i32
    return %arg1, %c0_i32 : i32, i32
  }
  func.func @transform_3(%arg0: i32, %arg1: i32) -> (i32, i32) {
    %c0_i32 = arith.constant 0 : i32
    %c0_i32_0 = arith.constant 0 : i32
    %c0_i32_1 = arith.constant 0 : i32
    return %c0_i32, %c0_i32_0 : i32, i32
  }
  func.func @transform_4(%arg0: i32, %arg1: i32) -> (i32, i32) {
    %c0_i32 = arith.constant 0 : i32
    %c0_i32_0 = arith.constant 0 : i32
    %c0_i32_1 = arith.constant 0 : i32
    return %c0_i32, %c0_i32_0 : i32, i32
  }
  func.func @transform_5(%arg0: i32, %arg1: i32) -> (i32, i32) {
    %c0_i32 = arith.constant 0 : i32
    %c0_i32_0 = arith.constant 0 : i32
    %c0_i32_1 = arith.constant 0 : i32
    return %c0_i32, %c0_i32_0 : i32, i32
  }
  func.func @transform_6(%arg0: i32, %arg1: i32) -> (i32, i32) {
    %c0_i32 = arith.constant 0 : i32
    %c0_i32_0 = arith.constant 0 : i32
    %c0_i32_1 = arith.constant 0 : i32
    return %c0_i32, %c0_i32_0 : i32, i32
  }
  func.func @transform_7(%arg0: i32, %arg1: i32) -> (i32, i32) {
    %c0_i32 = arith.constant 0 : i32
    %c0_i32_0 = arith.constant 0 : i32
    %c0_i32_1 = arith.constant 0 : i32
    return %c0_i32, %c0_i32_0 : i32, i32
  }
  func.func @transform_8(%arg0: i32, %arg1: i32) -> (i32, i32) {
    %c0_i32 = arith.constant 0 : i32
    %c0_i32_0 = arith.constant 0 : i32
    return %arg0, %c0_i32 : i32, i32
  }
}

</mosaic_0001>

<llo_original>
// kernel: tpu_custom_call.1
$region0: #{tpu_custom_call.1}
  #allocation0 [shape = 'u32[]', space=smem, size = 0x4, offset = 0x4, fixed_abs, tag = 'smem constant byte address 0x4 - core index']
  #allocation1 [shape = 'u32[144,128]{1,0:T(1,128)}', space=vmem, size = 0x12000, scoped, tag = 'internal scratch']
  #allocation2 [shape = 'f32[8,128]{1,0:T(8,128)}', space=vmem, size = 0x1000, scoped, tag = 'scratch operand']
  %s0 = inlined_call_operand.hbm [shape: bf16[8,1024], index: 0, kind: input, shape index: {}]
  %s1 = inlined_call_operand.hbm [shape: f32[8,128], index: 1, kind: input, shape index: {}]
  %s2 = inlined_call_operand.hbm [shape: bf16[1024,128], index: 2, kind: input, shape index: {}]
  %s3 = inlined_call_operand.vmem [shape: f32[1,128], index: 3, kind: input, shape index: {}]
  %s4 = inlined_call_operand.hbm [shape: bf16[128,256], index: 4, kind: input, shape index: {}]
  %s5 = inlined_call_operand.vmem [shape: f32[1,256], index: 5, kind: input, shape index: {}]
  %s6 = inlined_call_operand.hbm [shape: bf16[128,128], index: 6, kind: input, shape index: {}]
  %s7 = inlined_call_operand.vmem [shape: f32[1,128], index: 7, kind: input, shape index: {}]
  %s8 = inlined_call_operand.hbm [shape: bf16[8,128], index: 8, kind: output, shape index: {}]
  %s9 = sld [smem:[#allocation0]]
  $region93: #{tpu_custom_call.1} parent=0
    _
  %s11 = ssub.s32 1, %s9
  %s12 = scalar_select 0, %s11, %s9
  $region1: #{tpu_custom_call.1} parent=0
    #allocation3 [shape = 'u8[16384]{0}', space=vmem, size = 0x4000, scoped, tag = 'input window, operand 0']
    #allocation4 [shape = 's32[2]{0}', space=sflag, size = 0x8, scoped, tag = 'scoped memory for tpu_custom_call.1']
    #allocation5 [shape = 's32[2]{0}', space=sflag, size = 0x8, scoped, tag = 'scoped memory for tpu_custom_call.1']
    #allocation6 [shape = 'u8[4096]{0}', space=vmem, size = 0x1000, scoped, tag = 'input window, operand 1, single buffered']
    #allocation7 [shape = 's32[1]{0}', space=sflag, size = 0x4, scoped, tag = 'scoped memory for tpu_custom_call.1']
    #allocation8 [shape = 'u8[262144]{0}', space=vmem, size = 0x40000, scoped, tag = 'input window, operand 2']
    #allocation9 [shape = 'u8[65536]{0}', space=vmem, size = 0x10000, scoped, tag = 'input window, operand 4, single buffered']
    #allocation10 [shape = 'u8[32768]{0}', space=vmem, size = 0x8000, scoped, tag = 'input window, operand 6, single buffered']
    #allocation11 [shape = 's32[1]{0}', space=sflag, size = 0x4, scoped, tag = 'scoped memory for tpu_custom_call.1']
    #allocation12 [shape = 'u8[2048]{0}', space=vmem, size = 0x800, scoped, tag = 'output window, operand 0, single buffered']
    %13 = vsyncpa [#allocation4], 0
    %s14 = scalar_lea.sflag [#allocation4], 1
    %15 = vsyncpa %s14, 0
    %16 = vsyncpa [#allocation7], 0
    %17 = vsyncpa [#allocation11], 0
    %18 = vsyncpa [#allocation5], 0
    loop: start=0, step=1, limit=4
    $region2: #{tpu_custom_call.1} parent=1 // loop_pre_header
      _
    $region3: #{tpu_custom_call.1} parent=1 // loop_header
      %s20 = sphi 0, %s24
      %p21 = scmp.ge.s32.totalorder %s20, 4
      %s27 = sphi 0, %s39
      %s28 = sphi 0, %s35
      %s29 = sphi 0, %s27
      %s30 = sphi 0, %s28
      %s31 = sphi 0, %s29
      %s32 = sphi 0, %s30
      %s44 = sphi 0, %s46
      %s47 = sphi 0, %s44
      %s48 = sphi 0, %s47
      %s64 = sphi 0, %s48
      %s70 = sphi 0, %s72
      %s73 = sphi 0, %s70
      %s74 = sphi 0, %s73
      %s90 = sphi 0, %s74
      %s96 = sphi 0, %s98
      %s99 = sphi 0, %s96
      %s100 = sphi 0, %s99
      %s116 = sphi 0, %s100
      %s120 = sphi 0, %s120
      %s122 = sphi 0, %s120
      %s123 = sphi 0, %s122
      %s137 = sphi 0, %s123
      %s141 = sphi 0, %s141
      %s143 = sphi 0, %s141
      %s144 = sphi 0, %s143
      %s158 = sphi 0, %s144
      %s162 = sphi 0, %s162
      %s164 = sphi 0, %s162
      %s165 = sphi 0, %s164
      %s179 = sphi 0, %s165
      %s183 = sphi 0, %s183
      %s185 = sphi 0, %s183
      %s186 = sphi 0, %s185
      %s200 = sphi 0, %s186
      %s204 = sphi 0, %s204
      %s206 = sphi 0, %s204
      %s207 = sphi 0, %s206
      %s221 = sphi 0, %s207
      %s227 = sphi 0, %s229
      %s230 = sphi 0, %s227
      %s231 = sphi 0, %s230
      %s247 = sphi 0, %s231
    $region4: #{tpu_custom_call.1} parent=1 // loop_header_branch
      %23 = sbr.rel (%p21) target = $region8
    $region5: #{tpu_custom_call.1} parent=1 // loop_body
      %s25 = ssub.s32 %s20, 1
      %s26 = ssub.s32 %s20, 2
      %s33 = sadd.s32 1, %s28
      %p34 = scmp.ge.s32.totalorder %s33, 2
      %s35 = scalar_select %p34, 0, %s33
      %s36 = sadd.s32 1, %s27
      %s37 = scalar_select %p34, %s36, %s27
      %p38 = scmp.ge.s32.totalorder %s37, 1
      %s39 = scalar_select %p38, 0, %s37
      %s40 = ssub.s32 %s27, %s39
      %s41 = ssub.s32 %s28, %s35
      %s42 = sor.u32 %s40, %s41
      %p43 = scmp.eq.s32.totalorder %s42, 0
      %s45 = sadd.s32 %s44, 1
      %s46 = scalar_select %p43, %s44, %s45
      %p49 = pneg %p43
      %p50 = scmp.eq.s32.totalorder %s20, 1
      %p51 = por %p49, %p50
      %p52 = scmp.ne.s32.totalorder %s44, %s47
      %p53 = scmp.eq.s32.totalorder %s20, 0
      %p54 = por %p52, %p53
      %p55 = scmp.ne.s32.totalorder %s44, %s47
      %p56 = scmp.eq.s32.totalorder %s25, 1
      %p57 = por %p55, %p56
      %p58 = scmp.ne.s32.totalorder %s47, %s48
      %p59 = scmp.eq.s32.totalorder %s25, 0
      %p60 = por %p58, %p59
      %p61 = scmp.ne.s32.totalorder %s47, %s48
      %p62 = scmp.eq.s32.totalorder %s26, 1
      %p63 = por %p61, %p62
      %p65 = scmp.ne.s32.totalorder %s48, %s64
      %p66 = scmp.eq.s32.totalorder %s26, 0
      %p67 = por %p65, %p66
      %s68 = ssub.s32 %s27, %s39
      %p69 = scmp.eq.s32.totalorder %s68, 0
      %s71 = sadd.s32 %s70, 1
      %s72 = scalar_select %p69, %s70, %s71
      %p75 = pneg %p69
      %p76 = scmp.eq.s32.totalorder %s20, 1
      %p77 = por %p75, %p76
      %p78 = scmp.ne.s32.totalorder %s70, %s73
      %p79 = scmp.eq.s32.totalorder %s20, 0
      %p80 = por %p78, %p79
      %p81 = scmp.ne.s32.totalorder %s70, %s73
      %p82 = scmp.eq.s32.totalorder %s25, 1
      %p83 = por %p81, %p82
      %p84 = scmp.ne.s32.totalorder %s73, %s74
      %p85 = scmp.eq.s32.totalorder %s25, 0
      %p86 = por %p84, %p85
      %p87 = scmp.ne.s32.totalorder %s73, %s74
      %p88 = scmp.eq.s32.totalorder %s26, 1
      %p89 = por %p87, %p88
      %p91 = scmp.ne.s32.totalorder %s74, %s90
      %p92 = scmp.eq.s32.totalorder %s26, 0
      %p93 = por %p91, %p92
      %s94 = ssub.s32 %s28, %s35
      %p95 = scmp.eq.s32.totalorder %s94, 0
      %s97 = sadd.s32 %s96, 1
      %s98 = scalar_select %p95, %s96, %s97
      %p101 = pneg %p95
      %p102 = scmp.eq.s32.totalorder %s20, 1
      %p103 = por %p101, %p102
      %p104 = scmp.ne.s32.totalorder %s96, %s99
      %p105 = scmp.eq.s32.totalorder %s20, 0
      %p106 = por %p104, %p105
      %p107 = scmp.ne.s32.totalorder %s96, %s99
      %p108 = scmp.eq.s32.totalorder %s25, 1
      %p109 = por %p107, %p108
      %p110 = scmp.ne.s32.totalorder %s99, %s100
      %p111 = scmp.eq.s32.totalorder %s25, 0
      %p112 = por %p110, %p111
      %p113 = scmp.ne.s32.totalorder %s99, %s100
      %p114 = scmp.eq.s32.totalorder %s26, 1
      %p115 = por %p113, %p114
      %p117 = scmp.ne.s32.totalorder %s100, %s116
      %p118 = scmp.eq.s32.totalorder %s26, 0
      %p119 = por %p117, %p118
      %s121 = sadd.s32 %s120, 1
      %p124 = scmp.eq.s32.totalorder %s20, 1
      %p125 = scmp.ne.s32.totalorder %s120, %s122
      %p126 = scmp.eq.s32.totalorder %s20, 0
      %p127 = por %p125, %p126
      %p128 = scmp.ne.s32.totalorder %s120, %s122
      %p129 = scmp.eq.s32.totalorder %s25, 1
      %p130 = por %p128, %p129
      %p131 = scmp.ne.s32.totalorder %s122, %s123
      %p132 = scmp.eq.s32.totalorder %s25, 0
      %p133 = por %p131, %p132
      %p134 = scmp.ne.s32.totalorder %s122, %s123
      %p135 = scmp.eq.s32.totalorder %s26, 1
      %p136 = por %p134, %p135
      %p138 = scmp.ne.s32.totalorder %s123, %s137
      %p139 = scmp.eq.s32.totalorder %s26, 0
      %p140 = por %p138, %p139
      %s142 = sadd.s32 %s141, 1
      %p145 = scmp.eq.s32.totalorder %s20, 1
      %p146 = scmp.ne.s32.totalorder %s141, %s143
      %p147 = scmp.eq.s32.totalorder %s20, 0
      %p148 = por %p146, %p147
      %p149 = scmp.ne.s32.totalorder %s141, %s143
      %p150 = scmp.eq.s32.totalorder %s25, 1
      %p151 = por %p149, %p150
      %p152 = scmp.ne.s32.totalorder %s143, %s144
      %p153 = scmp.eq.s32.totalorder %s25, 0
      %p154 = por %p152, %p153
      %p155 = scmp.ne.s32.totalorder %s143, %s144
      %p156 = scmp.eq.s32.totalorder %s26, 1
      %p157 = por %p155, %p156
      %p159 = scmp.ne.s32.totalorder %s144, %s158
      %p160 = scmp.eq.s32.totalorder %s26, 0
      %p161 = por %p159, %p160
      %s163 = sadd.s32 %s162, 1
      %p166 = scmp.eq.s32.totalorder %s20, 1
      %p167 = scmp.ne.s32.totalorder %s162, %s164
      %p168 = scmp.eq.s32.totalorder %s20, 0
      %p169 = por %p167, %p168
      %p170 = scmp.ne.s32.totalorder %s162, %s164
      %p171 = scmp.eq.s32.totalorder %s25, 1
      %p172 = por %p170, %p171
      %p173 = scmp.ne.s32.totalorder %s164, %s165
      %p174 = scmp.eq.s32.totalorder %s25, 0
      %p175 = por %p173, %p174
      %p176 = scmp.ne.s32.totalorder %s164, %s165
      %p177 = scmp.eq.s32.totalorder %s26, 1
      %p178 = por %p176, %p177
      %p180 = scmp.ne.s32.totalorder %s165, %s179
      %p181 = scmp.eq.s32.totalorder %s26, 0
      %p182 = por %p180, %p181
      %s184 = sadd.s32 %s183, 1
      %p187 = scmp.eq.s32.totalorder %s20, 1
      %p188 = scmp.ne.s32.totalorder %s183, %s185
      %p189 = scmp.eq.s32.totalorder %s20, 0
      %p190 = por %p188, %p189
      %p191 = scmp.ne.s32.totalorder %s183, %s185
      %p192 = scmp.eq.s32.totalorder %s25, 1
      %p193 = por %p191, %p192
      %p194 = scmp.ne.s32.totalorder %s185, %s186
      %p195 = scmp.eq.s32.totalorder %s25, 0
      %p196 = por %p194, %p195
      %p197 = scmp.ne.s32.totalorder %s185, %s186
      %p198 = scmp.eq.s32.totalorder %s26, 1
      %p199 = por %p197, %p198
      %p201 = scmp.ne.s32.totalorder %s186, %s200
      %p202 = scmp.eq.s32.totalorder %s26, 0
      %p203 = por %p201, %p202
      %s205 = sadd.s32 %s204, 1
      %p208 = scmp.eq.s32.totalorder %s20, 1
      %p209 = scmp.ne.s32.totalorder %s204, %s206
      %p210 = scmp.eq.s32.totalorder %s20, 0
      %p211 = por %p209, %p210
      %p212 = scmp.ne.s32.totalorder %s204, %s206
      %p213 = scmp.eq.s32.totalorder %s25, 1
      %p214 = por %p212, %p213
      %p215 = scmp.ne.s32.totalorder %s206, %s207
      %p216 = scmp.eq.s32.totalorder %s25, 0
      %p217 = por %p215, %p216
      %p218 = scmp.ne.s32.totalorder %s206, %s207
      %p219 = scmp.eq.s32.totalorder %s26, 1
      %p220 = por %p218, %p219
      %p222 = scmp.ne.s32.totalorder %s207, %s221
      %p223 = scmp.eq.s32.totalorder %s26, 0
      %p224 = por %p222, %p223
      %s225 = ssub.s32 %s27, %s39
      %p226 = scmp.eq.s32.totalorder %s225, 0
      %s228 = sadd.s32 %s227, 1
      %s229 = scalar_select %p226, %s227, %s228
      %p232 = pneg %p226
      %p233 = scmp.eq.s32.totalorder %s20, 1
      %p234 = por %p232, %p233
      %p235 = scmp.ne.s32.totalorder %s227, %s230
      %p236 = scmp.eq.s32.totalorder %s20, 0
      %p237 = por %p235, %p236
      %p238 = scmp.ne.s32.totalorder %s227, %s230
      %p239 = scmp.eq.s32.totalorder %s25, 1
      %p240 = por %p238, %p239
      %p241 = scmp.ne.s32.totalorder %s230, %s231
      %p242 = scmp.eq.s32.totalorder %s25, 0
      %p243 = por %p241, %p242
      %p244 = scmp.ne.s32.totalorder %s230, %s231
      %p245 = scmp.eq.s32.totalorder %s26, 1
      %p246 = por %p244, %p245
      %p248 = scmp.ne.s32.totalorder %s231, %s247
      %p249 = scmp.eq.s32.totalorder %s26, 0
      %p250 = por %p248, %p249
      %p251 = scmp.le.s32.totalorder 1, %s20
      %p252 = scmp.lt.s32.totalorder %s20, 3
      %p253 = pnand %p251, %p252
      %p254 = pneg %p253
      // Predicated region
      $region9: #{tpu_custom_call.1} parent=5 // pred_check
        _
      $region10: #{tpu_custom_call.1} parent=5 // pred_check_branch
        %256 = sbr.rel (%p253) target = $region12
      $region11: #{tpu_custom_call.1} parent=5 // pred_region
        %s257 = ssub.s32 %s20, 1
        // Predicated region
        $region13: #{tpu_custom_call.1} parent=11 // pred_check
          %p258 = pneg %p86
        $region14: #{tpu_custom_call.1} parent=11 // pred_check_branch
          %260 = sbr.rel (%p258) target = $region16
        $region15: #{tpu_custom_call.1} parent=11 // pred_region
          %s262 = ssub.s32 128, 128
          %263 = vsyncadd [#allocation7], %s262
          %s264 = smul.addr %s29, 128
          %s265 = scalar_lea.hbm %s1, %s264
          %s267 = sshll.u32 [#allocation6], 4
          %s268 = int_to_ptr.vmem [resolvable:$true] %s267
          %270 = dma.hbm_to_vmem [thread:$0]  %s265, 128, %s268, [#allocation7]
        $region16: #{tpu_custom_call.1} parent=11 // pred_fallthru
          _
        // Predicated region
        $region17: #{tpu_custom_call.1} parent=11 // pred_check
          %p271 = pneg %p133
        $region18: #{tpu_custom_call.1} parent=11 // pred_check_branch
          %273 = sbr.rel (%p271) target = $region20
        $region19: #{tpu_custom_call.1} parent=11 // pred_region
          _
        $region20: #{tpu_custom_call.1} parent=11 // pred_fallthru
          _
        // Predicated region
        $region21: #{tpu_custom_call.1} parent=11 // pred_check
          %p274 = pneg %p154
        $region22: #{tpu_custom_call.1} parent=11 // pred_check_branch
          %276 = sbr.rel (%p274) target = $region24
        $region23: #{tpu_custom_call.1} parent=11 // pred_region
          %s278 = ssub.s32 2048, 2048
          %279 = vsyncadd [#allocation7], %s278
          %s280 = sshll.u32 [#allocation9], 4
          %s281 = int_to_ptr.vmem [resolvable:$true] %s280
          %286 = dma.hbm_to_vmem [thread:$0]  %s4, 2048, %s281, [#allocation7], 128, 128, 8
        $region24: #{tpu_custom_call.1} parent=11 // pred_fallthru
          _
        // Predicated region
        $region25: #{tpu_custom_call.1} parent=11 // pred_check
          %p287 = pneg %p175
        $region26: #{tpu_custom_call.1} parent=11 // pred_check_branch
          %289 = sbr.rel (%p287) target = $region28
        $region27: #{tpu_custom_call.1} parent=11 // pred_region
          _
        $region28: #{tpu_custom_call.1} parent=11 // pred_fallthru
          _
        // Predicated region
        $region29: #{tpu_custom_call.1} parent=11 // pred_check
          %p290 = pneg %p196
        $region30: #{tpu_custom_call.1} parent=11 // pred_check_branch
          %292 = sbr.rel (%p290) target = $region32
        $region31: #{tpu_custom_call.1} parent=11 // pred_region
          %s294 = ssub.s32 1024, 1024
          %295 = vsyncadd [#allocation11], %s294
          %s296 = sshll.u32 [#allocation10], 4
          %s297 = int_to_ptr.vmem [resolvable:$true] %s296
          %302 = dma.hbm_to_vmem [thread:$0]  %s6, 1024, %s297, [#allocation11], 64, 64, 4
        $region32: #{tpu_custom_call.1} parent=11 // pred_fallthru
          _
        // Predicated region
        $region33: #{tpu_custom_call.1} parent=11 // pred_check
          %p303 = pneg %p217
        $region34: #{tpu_custom_call.1} parent=11 // pred_check_branch
          %305 = sbr.rel (%p303) target = $region36
        $region35: #{tpu_custom_call.1} parent=11 // pred_region
          _
        $region36: #{tpu_custom_call.1} parent=11 // pred_fallthru
          _
      $region12: #{tpu_custom_call.1} parent=5 // pred_fallthru
        _
      %p306 = scmp.lt.s32.totalorder %s20, 2
      // Predicated region
      $region37: #{tpu_custom_call.1} parent=5 // pred_check
        %p307 = pneg %p306
      $region38: #{tpu_custom_call.1} parent=5 // pred_check_branch
        %309 = sbr.rel (%p307) target = $region40
      $region39: #{tpu_custom_call.1} parent=5 // pred_region
        // Predicated region
        $region41: #{tpu_custom_call.1} parent=39 // pred_check
          %p310 = pneg %p54
        $region42: #{tpu_custom_call.1} parent=39 // pred_check_branch
          %312 = sbr.rel (%p310) target = $region44
        $region43: #{tpu_custom_call.1} parent=39 // pred_region
          %s313 = sand.u32 %s20, 1
          %s314 = scalar_lea.sflag [#allocation4], %s313
          %s315 = sand.u32 %s44, 1
          %s316 = smul.addr %s315, 16
          %s317 = scalar_lea.vmem [#allocation3], %s316
          %s318 = smul.u32 4, %s28
          %s320 = ssub.s32 256, 256
          %321 = vsyncadd %s314, %s320
          %s322 = smul.addr %s27, 8
          %s323 = sadd.s32 %s318, %s322
          %s324 = smul.addr %s323, 64
          %s325 = scalar_lea.hbm %s0, %s324
          %s327 = sshll.u32 %s317, 4
          %s328 = int_to_ptr.vmem [resolvable:$true] %s327
          %330 = dma.hbm_to_vmem [thread:$0]  %s325, 256, %s328, %s314
        $region44: #{tpu_custom_call.1} parent=39 // pred_fallthru
          _
        // Predicated region
        $region45: #{tpu_custom_call.1} parent=39 // pred_check
          %p331 = pneg %p106
        $region46: #{tpu_custom_call.1} parent=39 // pred_check_branch
          %333 = sbr.rel (%p331) target = $region48
        $region47: #{tpu_custom_call.1} parent=39 // pred_region
          %s334 = sand.u32 %s20, 1
          %s335 = scalar_lea.sflag [#allocation4], %s334
          %s336 = sand.u32 %s96, 1
          %s337 = smul.addr %s336, 256
          %s338 = scalar_lea.vmem [#allocation8], %s337
          %s339 = smul.u32 64, %s28
          %s341 = ssub.s32 4096, 4096
          %342 = vsyncadd %s335, %s341
          %s343 = smul.addr %s339, 64
          %s344 = scalar_lea.hbm %s2, %s343
          %s345 = sshll.u32 %s338, 4
          %s346 = int_to_ptr.vmem [resolvable:$true] %s345
          %351 = dma.hbm_to_vmem [thread:$0]  %s344, 4096, %s346, %s335, 64, 64, 4
        $region48: #{tpu_custom_call.1} parent=39 // pred_fallthru
          _
      $region40: #{tpu_custom_call.1} parent=5 // pred_fallthru
        _
      %p352 = scmp.le.s32.totalorder 1, %s20
      %p353 = scmp.lt.s32.totalorder %s20, 3
      %p354 = pnand %p352, %p353
      %p355 = pneg %p354
      // Predicated region
      $region49: #{tpu_custom_call.1} parent=5 // pred_check
        _
      $region50: #{tpu_custom_call.1} parent=5 // pred_check_branch
        %357 = sbr.rel (%p354) target = $region52
      $region51: #{tpu_custom_call.1} parent=5 // pred_region
        %s358 = ssub.s32 %s20, 1
        %s359 = sand.u32 %s25, 1
        %s360 = scalar_lea.sflag [#allocation4], %s359
        %s361 = sand.u32 %s47, 1
        %s362 = smul.addr %s361, 16
        %s363 = scalar_lea.vmem [#allocation3], %s362
        // Predicated region
        $region53: #{tpu_custom_call.1} parent=51 // pred_check
          %p364 = pneg %p60
        $region54: #{tpu_custom_call.1} parent=51 // pred_check_branch
          %366 = sbr.rel (%p364) target = $region56
        $region55: #{tpu_custom_call.1} parent=51 // pred_region
          %367 = dma.done %s360, 256
        $region56: #{tpu_custom_call.1} parent=51 // pred_fallthru
          _
        // Predicated region
        $region57: #{tpu_custom_call.1} parent=51 // pred_check
          %p368 = pneg %p86
        $region58: #{tpu_custom_call.1} parent=51 // pred_check_branch
          %370 = sbr.rel (%p368) target = $region60
        $region59: #{tpu_custom_call.1} parent=51 // pred_region
          %371 = dma.done [#allocation7], 128
        $region60: #{tpu_custom_call.1} parent=51 // pred_fallthru
          _
        %s372 = sand.u32 %s25, 1
        %s373 = scalar_lea.sflag [#allocation4], %s372
        %s374 = sand.u32 %s99, 1
        %s375 = smul.addr %s374, 256
        %s376 = scalar_lea.vmem [#allocation8], %s375
        // Predicated region
        $region61: #{tpu_custom_call.1} parent=51 // pred_check
          %p377 = pneg %p112
        $region62: #{tpu_custom_call.1} parent=51 // pred_check_branch
          %379 = sbr.rel (%p377) target = $region64
        $region63: #{tpu_custom_call.1} parent=51 // pred_region
          %380 = dma.done %s373, 4096
        $region64: #{tpu_custom_call.1} parent=51 // pred_fallthru
          _
        // Predicated region
        $region65: #{tpu_custom_call.1} parent=51 // pred_check
          %p381 = pneg %p154
        $region66: #{tpu_custom_call.1} parent=51 // pred_check_branch
          %383 = sbr.rel (%p381) target = $region68
        $region67: #{tpu_custom_call.1} parent=51 // pred_region
          %384 = dma.done [#allocation7], 2048
        $region68: #{tpu_custom_call.1} parent=51 // pred_fallthru
          _
        // Predicated region
        $region69: #{tpu_custom_call.1} parent=51 // pred_check
          %p385 = pneg %p196
        $region70: #{tpu_custom_call.1} parent=51 // pred_check_branch
          %387 = sbr.rel (%p385) target = $region72
        $region71: #{tpu_custom_call.1} parent=51 // pred_region
          %388 = dma.done [#allocation11], 1024
        $region72: #{tpu_custom_call.1} parent=51 // pred_fallthru
          _
        %s389 = sand.u32 %s25, 1
        %s390 = scalar_lea.sflag [#allocation4], %s389
        %s391 = sand.u32 %s47, 1
        %s392 = smul.addr %s391, 16
        %s393 = scalar_lea.vmem [#allocation3], %s392
        %p394 = pneg %p60
        %p395 = pneg %p57
        %p396 = pneg %p86
        %p397 = pneg %p83
        %s398 = sand.u32 %s25, 1
        %s399 = scalar_lea.sflag [#allocation4], %s398
        %s400 = sand.u32 %s99, 1
        %s401 = smul.addr %s400, 256
        %s402 = scalar_lea.vmem [#allocation8], %s401
        %p403 = pneg %p112
        %p404 = pneg %p109
        %p405 = pneg %p133
        %p406 = pneg %p130
        %p407 = pneg %p154
        %p408 = pneg %p151
        %p409 = pneg %p175
        %p410 = pneg %p172
        %p411 = pneg %p196
        %p412 = pneg %p193
        %p413 = pneg %p217
        %p414 = pneg %p214
        %p415 = pneg %p243
        %p416 = pneg %p240
        %s417 = smul.u32 4, %s30
        %s418 = smul.u32 64, %s30
        %p420 = scmp.eq.s32.totalorder %s30, 0
        // Predicated region
        $region73: #{tpu_custom_call.1} parent=51 // pred_check
          %p421 = pneg %p420
        $region74: #{tpu_custom_call.1} parent=51 // pred_check_branch
          %423 = sbr.rel (%p421) target = $region76
        $region75: #{tpu_custom_call.1} parent=51 // pred_region
          %424 = vst [vmem:[#allocation2] sm:$0xff] 0.0
        $region76: #{tpu_custom_call.1} parent=51 // pred_fallthru
          _
        %v425 = vld [vmem:[#allocation2] sm:$0xff]
        %v426 = vld [vmem:[%s363] sm:$0xff]
        %v427 = vld [vmem:[%s363 + $0x8] sm:$0xff]
        %v428 = vld [vmem:[%s376] sm:$0xf]
        %v429 = vld [vmem:[%s376 + $0x4] sm:$0xf]
        %v430 = vld [vmem:[%s376 + $0x8] sm:$0xf]
        %v431 = vld [vmem:[%s376 + $0xc] sm:$0xf]
        %v432 = vld [vmem:[%s376 + $0x10] sm:$0xf]
        %v433 = vld [vmem:[%s376 + $0x14] sm:$0xf]
        %v434 = vld [vmem:[%s376 + $0x18] sm:$0xf]
        %v435 = vld [vmem:[%s376 + $0x1c] sm:$0xf]
        %v436 = vld [vmem:[%s376 + $0x20] sm:$0xf]
        %v437 = vld [vmem:[%s376 + $0x24] sm:$0xf]
        %v438 = vld [vmem:[%s376 + $0x28] sm:$0xf]
        %v439 = vld [vmem:[%s376 + $0x2c] sm:$0xf]
        %v440 = vld [vmem:[%s376 + $0x30] sm:$0xf]
        %v441 = vld [vmem:[%s376 + $0x34] sm:$0xf]
        %v442 = vld [vmem:[%s376 + $0x38] sm:$0xf]
        %v443 = vld [vmem:[%s376 + $0x3c] sm:$0xf]
        %v444 = vld [vmem:[%s376 + $0x40] sm:$0xf]
        %v445 = vld [vmem:[%s376 + $0x44] sm:$0xf]
        %v446 = vld [vmem:[%s376 + $0x48] sm:$0xf]
        %v447 = vld [vmem:[%s376 + $0x4c] sm:$0xf]
        %v448 = vld [vmem:[%s376 + $0x50] sm:$0xf]
        %v449 = vld [vmem:[%s376 + $0x54] sm:$0xf]
        %v450 = vld [vmem:[%s376 + $0x58] sm:$0xf]
        %v451 = vld [vmem:[%s376 + $0x5c] sm:$0xf]
        %v452 = vld [vmem:[%s376 + $0x60] sm:$0xf]
        %v453 = vld [vmem:[%s376 + $0x64] sm:$0xf]
        %v454 = vld [vmem:[%s376 + $0x68] sm:$0xf]
        %v455 = vld [vmem:[%s376 + $0x6c] sm:$0xf]
        %v456 = vld [vmem:[%s376 + $0x70] sm:$0xf]
        %v457 = vld [vmem:[%s376 + $0x74] sm:$0xf]
        %v458 = vld [vmem:[%s376 + $0x78] sm:$0xf]
        %v459 = vld [vmem:[%s376 + $0x7c] sm:$0xf]
        %v460 = vld [vmem:[%s376 + $0x80] sm:$0xf]
        %v461 = vld [vmem:[%s376 + $0x84] sm:$0xf]
        %v462 = vld [vmem:[%s376 + $0x88] sm:$0xf]
        %v463 = vld [vmem:[%s376 + $0x8c] sm:$0xf]
        %v464 = vld [vmem:[%s376 + $0x90] sm:$0xf]
        %v465 = vld [vmem:[%s376 + $0x94] sm:$0xf]
        %v466 = vld [vmem:[%s376 + $0x98] sm:$0xf]
        %v467 = vld [vmem:[%s376 + $0x9c] sm:$0xf]
        %v468 = vld [vmem:[%s376 + $0xa0] sm:$0xf]
        %v469 = vld [vmem:[%s376 + $0xa4] sm:$0xf]
        %v470 = vld [vmem:[%s376 + $0xa8] sm:$0xf]
        %v471 = vld [vmem:[%s376 + $0xac] sm:$0xf]
        %v472 = vld [vmem:[%s376 + $0xb0] sm:$0xf]
        %v473 = vld [vmem:[%s376 + $0xb4] sm:$0xf]
        %v474 = vld [vmem:[%s376 + $0xb8] sm:$0xf]
        %v475 = vld [vmem:[%s376 + $0xbc] sm:$0xf]
        %v476 = vld [vmem:[%s376 + $0xc0] sm:$0xf]
        %v477 = vld [vmem:[%s376 + $0xc4] sm:$0xf]
        %v478 = vld [vmem:[%s376 + $0xc8] sm:$0xf]
        %v479 = vld [vmem:[%s376 + $0xcc] sm:$0xf]
        %v480 = vld [vmem:[%s376 + $0xd0] sm:$0xf]
        %v481 = vld [vmem:[%s376 + $0xd4] sm:$0xf]
        %v482 = vld [vmem:[%s376 + $0xd8] sm:$0xf]
        %v483 = vld [vmem:[%s376 + $0xdc] sm:$0xf]
        %v484 = vld [vmem:[%s376 + $0xe0] sm:$0xf]
        %v485 = vld [vmem:[%s376 + $0xe4] sm:$0xf]
        %v486 = vld [vmem:[%s376 + $0xe8] sm:$0xf]
        %v487 = vld [vmem:[%s376 + $0xec] sm:$0xf]
        %v488 = vld [vmem:[%s376 + $0xf0] sm:$0xf]
        %v489 = vld [vmem:[%s376 + $0xf4] sm:$0xf]
        %v490 = vld [vmem:[%s376 + $0xf8] sm:$0xf]
        %v491 = vld [vmem:[%s376 + $0xfc] sm:$0xf]
        %v494 = vunpack.c.l.b16 %v426
        %v495 = vunpack.c.h.b16 %v426
        %v496 = vunpack.c.l.b16 %v427
        %v497 = vunpack.c.h.b16 %v427
        %v498 = vpack.c.b16 %v494, %v494
        %v499 = vpack.c.b16 %v495, %v495
        %v500 = vpack.c.b16 %v496, %v496
        %v501 = vpack.c.b16 %v497, %v497
        %v570 = vunpack.c.l.b16 %v428
        %v571 = vunpack.c.l.b16 %v429
        %v572 = vunpack.c.l.b16 %v430
        %v573 = vunpack.c.l.b16 %v431
        %v574 = vunpack.c.l.b16 %v432
        %v575 = vunpack.c.l.b16 %v433
        %v576 = vunpack.c.l.b16 %v434
        %v577 = vunpack.c.l.b16 %v435
        %v578 = vunpack.c.l.b16 %v436
        %v579 = vunpack.c.l.b16 %v437
        %v580 = vunpack.c.l.b16 %v438
        %v581 = vunpack.c.l.b16 %v439
        %v582 = vunpack.c.l.b16 %v440
        %v583 = vunpack.c.l.b16 %v441
        %v584 = vunpack.c.l.b16 %v442
        %v585 = vunpack.c.l.b16 %v443
        %v586 = vunpack.c.l.b16 %v444
        %v587 = vunpack.c.l.b16 %v445
        %v588 = vunpack.c.l.b16 %v446
        %v589 = vunpack.c.l.b16 %v447
        %v590 = vunpack.c.l.b16 %v448
        %v591 = vunpack.c.l.b16 %v449
        %v592 = vunpack.c.l.b16 %v450
        %v593 = vunpack.c.l.b16 %v451
        %v594 = vunpack.c.l.b16 %v452
        %v595 = vunpack.c.l.b16 %v453
        %v596 = vunpack.c.l.b16 %v454
        %v597 = vunpack.c.l.b16 %v455
        %v598 = vunpack.c.l.b16 %v456
        %v599 = vunpack.c.l.b16 %v457
        %v600 = vunpack.c.l.b16 %v458
        %v601 = vunpack.c.l.b16 %v459
        %v602 = vunpack.c.l.b16 %v460
        %v603 = vunpack.c.l.b16 %v461
        %v604 = vunpack.c.l.b16 %v462
        %v605 = vunpack.c.l.b16 %v463
        %v606 = vunpack.c.l.b16 %v464
        %v607 = vunpack.c.l.b16 %v465
        %v608 = vunpack.c.l.b16 %v466
        %v609 = vunpack.c.l.b16 %v467
        %v610 = vunpack.c.l.b16 %v468
        %v611 = vunpack.c.l.b16 %v469
        %v612 = vunpack.c.l.b16 %v470
        %v613 = vunpack.c.l.b16 %v471
        %v614 = vunpack.c.l.b16 %v472
        %v615 = vunpack.c.l.b16 %v473
        %v616 = vunpack.c.l.b16 %v474
        %v617 = vunpack.c.l.b16 %v475
        %v618 = vunpack.c.l.b16 %v476
        %v619 = vunpack.c.l.b16 %v477
        %v620 = vunpack.c.l.b16 %v478
        %v621 = vunpack.c.l.b16 %v479
        %v622 = vunpack.c.l.b16 %v480
        %v623 = vunpack.c.l.b16 %v481
        %v624 = vunpack.c.l.b16 %v482
        %v625 = vunpack.c.l.b16 %v483
        %v626 = vunpack.c.l.b16 %v484
        %v627 = vunpack.c.l.b16 %v485
        %v628 = vunpack.c.l.b16 %v486
        %v629 = vunpack.c.l.b16 %v487
        %v630 = vunpack.c.l.b16 %v488
        %v631 = vunpack.c.l.b16 %v489
        %v632 = vunpack.c.l.b16 %v490
        %v633 = vunpack.c.l.b16 %v491
        %v634 = vpack.c.b16 %v571, %v570
        %v635 = vpack.c.b16 %v573, %v572
        %v636 = vpack.c.b16 %v575, %v574
        %v637 = vpack.c.b16 %v577, %v576
        %v638 = vpack.c.b16 %v579, %v578
        %v639 = vpack.c.b16 %v581, %v580
        %v640 = vpack.c.b16 %v583, %v582
        %v641 = vpack.c.b16 %v585, %v584
        %v642 = vpack.c.b16 %v587, %v586
        %v643 = vpack.c.b16 %v589, %v588
        %v644 = vpack.c.b16 %v591, %v590
        %v645 = vpack.c.b16 %v593, %v592
        %v646 = vpack.c.b16 %v595, %v594
        %v647 = vpack.c.b16 %v597, %v596
        %v648 = vpack.c.b16 %v599, %v598
        %v649 = vpack.c.b16 %v601, %v600
        %v650 = vpack.c.b16 %v603, %v602
        %v651 = vpack.c.b16 %v605, %v604
        %v652 = vpack.c.b16 %v607, %v606
        %v653 = vpack.c.b16 %v609, %v608
        %v654 = vpack.c.b16 %v611, %v610
        %v655 = vpack.c.b16 %v613, %v612
        %v656 = vpack.c.b16 %v615, %v614
        %v657 = vpack.c.b16 %v617, %v616
        %v658 = vpack.c.b16 %v619, %v618
        %v659 = vpack.c.b16 %v621, %v620
        %v660 = vpack.c.b16 %v623, %v622
        %v661 = vpack.c.b16 %v625, %v624
        %v662 = vpack.c.b16 %v627, %v626
        %v663 = vpack.c.b16 %v629, %v628
        %v664 = vpack.c.b16 %v631, %v630
        %v665 = vpack.c.b16 %v633, %v632
        %698 = vmatprep.subr.bf16.mxu0 0
        %699 = vmatpush1.bf16.msra.mxu0 %v634
        %700 = vmatprep.subr.bf16.mxu0 0
        %701 = vmatpush1.bf16.msra.mxu0 %v635
        %702 = vmatprep.subr.bf16.mxu0 0
        %703 = vmatpush1.bf16.msra.mxu0 %v636
        %704 = vmatprep.subr.bf16.mxu0 0
        %705 = vmatpush1.bf16.msra.mxu0 %v637
        %706 = vmatprep.subr.bf16.mxu0 0
        %707 = vmatpush1.bf16.msra.mxu0 %v638
        %708 = vmatprep.subr.bf16.mxu0 0
        %709 = vmatpush1.bf16.msra.mxu0 %v639
        %710 = vmatprep.subr.bf16.mxu0 0
        %711 = vmatpush1.bf16.msra.mxu0 %v640
        %712 = vmatprep.subr.bf16.mxu0 0
        %713 = vmatpush1.bf16.msra.mxu0 %v641
        %714 = vmatprep.subr.bf16.mxu0 0
        %715 = vmatpush1.bf16.msra.mxu0 %v642
        %716 = vmatprep.subr.bf16.mxu0 0
        %717 = vmatpush1.bf16.msra.mxu0 %v643
        %718 = vmatprep.subr.bf16.mxu0 0
        %719 = vmatpush1.bf16.msra.mxu0 %v644
        %720 = vmatprep.subr.bf16.mxu0 0
        %721 = vmatpush1.bf16.msra.mxu0 %v645
        %722 = vmatprep.subr.bf16.mxu0 0
        %723 = vmatpush1.bf16.msra.mxu0 %v646
        %724 = vmatprep.subr.bf16.mxu0 0
        %725 = vmatpush1.bf16.msra.mxu0 %v647
        %726 = vmatprep.subr.bf16.mxu0 0
        %727 = vmatpush1.bf16.msra.mxu0 %v648
        %728 = vmatprep.subr.bf16.mxu0 0
        %729 = vmatpush1.bf16.msra.mxu0 %v649
        %730 = vmatprep.mubr.bf16.mxu0 %v499
        %731 = vmatmul.mubr.bf16.gmra.mrb[0].mxu0 %v498
        %v732 = vpop.f32.mrb[0].mxu0
        %v733 = vadd.f32 0.0, %v732
        %v734 = vpop.f32.mrb[0].mxu0
        %v735 = vpop.f32.mrb[0].mxu0
        %v736 = vpop.f32.mrb[0].mxu0
        %737 = vdwg.mxu0
        %738 = vmatprep.subr.bf16.mxu0 0
        %739 = vmatpush1.bf16.msra.mxu0 %v650
        %740 = vmatprep.subr.bf16.mxu0 0
        %741 = vmatpush1.bf16.msra.mxu0 %v651
        %742 = vmatprep.subr.bf16.mxu0 0
        %743 = vmatpush1.bf16.msra.mxu0 %v652
        %744 = vmatprep.subr.bf16.mxu0 0
        %745 = vmatpush1.bf16.msra.mxu0 %v653
        %746 = vmatprep.subr.bf16.mxu0 0
        %747 = vmatpush1.bf16.msra.mxu0 %v654
        %748 = vmatprep.subr.bf16.mxu0 0
        %749 = vmatpush1.bf16.msra.mxu0 %v655
        %750 = vmatprep.subr.bf16.mxu0 0
        %751 = vmatpush1.bf16.msra.mxu0 %v656
        %752 = vmatprep.subr.bf16.mxu0 0
        %753 = vmatpush1.bf16.msra.mxu0 %v657
        %754 = vmatprep.subr.bf16.mxu0 0
        %755 = vmatpush1.bf16.msra.mxu0 %v658
        %756 = vmatprep.subr.bf16.mxu0 0
        %757 = vmatpush1.bf16.msra.mxu0 %v659
        %758 = vmatprep.subr.bf16.mxu0 0
        %759 = vmatpush1.bf16.msra.mxu0 %v660
        %760 = vmatprep.subr.bf16.mxu0 0
        %761 = vmatpush1.bf16.msra.mxu0 %v661
        %762 = vmatprep.subr.bf16.mxu0 0
        %763 = vmatpush1.bf16.msra.mxu0 %v662
        %764 = vmatprep.subr.bf16.mxu0 0
        %765 = vmatpush1.bf16.msra.mxu0 %v663
        %766 = vmatprep.subr.bf16.mxu0 0
        %767 = vmatpush1.bf16.msra.mxu0 %v664
        %768 = vmatprep.subr.bf16.mxu0 0
        %769 = vmatpush1.bf16.msra.mxu0 %v665
        %770 = vmatprep.mubr.bf16.mxu0 %v501
        %771 = vmatmul.mubr.bf16.gmra.mrb[0].mxu0 %v500
        %v772 = vpop.f32.mrb[0].mxu0
        %v773 = vadd.f32 %v733, %v772
        %v774 = vpop.f32.mrb[0].mxu0
        %v775 = vpop.f32.mrb[0].mxu0
        %v776 = vpop.f32.mrb[0].mxu0
        %777 = vdwg.mxu0
        %v778 = vadd.f32 %v425, %v773
        %779 = vst [vmem:[#allocation2] sm:$0xff] %v778
        %p780 = scmp.eq.s32.totalorder %s30, 1
        // Predicated region
        $region77: #{tpu_custom_call.1} parent=51 // pred_check
          %p781 = pneg %p780
        $region78: #{tpu_custom_call.1} parent=51 // pred_check_branch
          %783 = sbr.rel (%p781) target = $region80
        $region79: #{tpu_custom_call.1} parent=51 // pred_region
          %v784 = vld [vmem:[#allocation2] sm:$0xff]
          %v785 = vld [vmem:[%s3] sm:$0x1]
          %v787 = vlaneseq
          %v788 = vshrl.u32 %v787, 7
          %v789 = vsub.s32 0, %v788
          %v790 = vrot.slane %v785, %v789
          %v792 = vadd.f32 %v784, %v790
          %v793 = vmax.f32 %v792, 0.0
          %v794 = vpack.c.bf16 %v793, %v793
          %v795 = vld [vmem:[#allocation9] sm:$0xff]
          %v796 = vld [vmem:[#allocation9 + $0x8] sm:$0xff]
          %v797 = vld [vmem:[#allocation9 + $0x10] sm:$0xff]
          %v798 = vld [vmem:[#allocation9 + $0x18] sm:$0xff]
          %v799 = vld [vmem:[#allocation9 + $0x20] sm:$0xff]
          %v800 = vld [vmem:[#allocation9 + $0x28] sm:$0xff]
          %v801 = vld [vmem:[#allocation9 + $0x30] sm:$0xff]
          %v802 = vld [vmem:[#allocation9 + $0x38] sm:$0xff]
          %v803 = vld [vmem:[#allocation9 + $0x40] sm:$0xff]
          %v804 = vld [vmem:[#allocation9 + $0x48] sm:$0xff]
          %v805 = vld [vmem:[#allocation9 + $0x50] sm:$0xff]
          %v806 = vld [vmem:[#allocation9 + $0x58] sm:$0xff]
          %v807 = vld [vmem:[#allocation9 + $0x60] sm:$0xff]
          %v808 = vld [vmem:[#allocation9 + $0x68] sm:$0xff]
          %v809 = vld [vmem:[#allocation9 + $0x70] sm:$0xff]
          %v810 = vld [vmem:[#allocation9 + $0x78] sm:$0xff]
          %v811 = vld [vmem:[%s5] sm:$0x3]
          %v813 = vlaneseq
          %v814 = vshrl.u32 %v813, 7
          %v815 = vsub.s32 0, %v814
          %v816 = vrot.slane %v811, %v815
          %v817 = vlaneseq
          %v818 = vshrl.u32 %v817, 7
          %v819 = vsub.s32 1, %v818
          %v820 = vrot.slane %v811, %v819
          %v839 = vunpack.c.l.b16 %v795
          %v840 = vunpack.c.h.b16 %v795
          %v841 = vunpack.c.l.b16 %v796
          %v842 = vunpack.c.h.b16 %v796
          %v843 = vunpack.c.l.b16 %v797
          %v844 = vunpack.c.h.b16 %v797
          %v845 = vunpack.c.l.b16 %v798
          %v846 = vunpack.c.h.b16 %v798
          %v847 = vunpack.c.l.b16 %v799
          %v848 = vunpack.c.h.b16 %v799
          %v849 = vunpack.c.l.b16 %v800
          %v850 = vunpack.c.h.b16 %v800
          %v851 = vunpack.c.l.b16 %v801
          %v852 = vunpack.c.h.b16 %v801
          %v853 = vunpack.c.l.b16 %v802
          %v854 = vunpack.c.h.b16 %v802
          %v855 = vunpack.c.l.b16 %v803
          %v856 = vunpack.c.h.b16 %v803
          %v857 = vunpack.c.l.b16 %v804
          %v858 = vunpack.c.h.b16 %v804
          %v859 = vunpack.c.l.b16 %v805
          %v860 = vunpack.c.h.b16 %v805
          %v861 = vunpack.c.l.b16 %v806
          %v862 = vunpack.c.h.b16 %v806
          %v863 = vunpack.c.l.b16 %v807
          %v864 = vunpack.c.h.b16 %v807
          %v865 = vunpack.c.l.b16 %v808
          %v866 = vunpack.c.h.b16 %v808
          %v867 = vunpack.c.l.b16 %v809
          %v868 = vunpack.c.h.b16 %v809
          %v869 = vunpack.c.l.b16 %v810
          %v870 = vunpack.c.h.b16 %v810
          %v871 = vpack.c.b16 %v841, %v839
          %v872 = vpack.c.b16 %v842, %v840
          %v873 = vpack.c.b16 %v845, %v843
          %v874 = vpack.c.b16 %v846, %v844
          %v875 = vpack.c.b16 %v849, %v847
          %v876 = vpack.c.b16 %v850, %v848
          %v877 = vpack.c.b16 %v853, %v851
          %v878 = vpack.c.b16 %v854, %v852
          %v879 = vpack.c.b16 %v857, %v855
          %v880 = vpack.c.b16 %v858, %v856
          %v881 = vpack.c.b16 %v861, %v859
          %v882 = vpack.c.b16 %v862, %v860
          %v883 = vpack.c.b16 %v865, %v863
          %v884 = vpack.c.b16 %v866, %v864
          %v885 = vpack.c.b16 %v869, %v867
          %v886 = vpack.c.b16 %v870, %v868
          %903 = vmatprep.subr.bf16.mxu0 %v872
          %904 = vmatpush1.bf16.msra.mxu0 %v871
          %905 = vmatprep.subr.bf16.mxu0 %v874
          %906 = vmatpush1.bf16.msra.mxu0 %v873
          %907 = vmatprep.subr.bf16.mxu0 %v876
          %908 = vmatpush1.bf16.msra.mxu0 %v875
          %909 = vmatprep.subr.bf16.mxu0 %v878
          %910 = vmatpush1.bf16.msra.mxu0 %v877
          %911 = vmatprep.subr.bf16.mxu0 %v880
          %912 = vmatpush1.bf16.msra.mxu0 %v879
          %913 = vmatprep.subr.bf16.mxu0 %v882
          %914 = vmatpush1.bf16.msra.mxu0 %v881
          %915 = vmatprep.subr.bf16.mxu0 %v884
          %916 = vmatpush1.bf16.msra.mxu0 %v883
          %917 = vmatprep.subr.bf16.mxu0 %v886
          %918 = vmatpush1.bf16.msra.mxu0 %v885
          %919 = vmatprep.subr.bf16.mxu0 0
          %920 = vmatpush1.bf16.msra.mxu0 0
          %921 = vmatprep.subr.bf16.mxu0 0
          %922 = vmatpush1.bf16.msra.mxu0 0
          %923 = vmatprep.subr.bf16.mxu0 0
          %924 = vmatpush1.bf16.msra.mxu0 0
          %925 = vmatprep.subr.bf16.mxu0 0
          %926 = vmatpush1.bf16.msra.mxu0 0
          %927 = vmatprep.subr.bf16.mxu0 0
          %928 = vmatpush1.bf16.msra.mxu0 0
          %929 = vmatprep.subr.bf16.mxu0 0
          %930 = vmatpush1.bf16.msra.mxu0 0
          %931 = vmatprep.subr.bf16.mxu0 0
          %932 = vmatpush1.bf16.msra.mxu0 0
          %933 = vmatprep.subr.bf16.mxu0 0
          %934 = vmatpush1.bf16.msra.mxu0 0
          %935 = vmatprep.mubr.bf16.mxu0 0
          %936 = vmatmul.mubr.bf16.gmra.mrb[0].mxu0 %v794
          %v937 = vpop.f32.mrb[0].mxu0
          %v938 = vadd.f32 %v816, %v937
          %v939 = vpop.f32.mrb[0].mxu0
          %v940 = vadd.f32 %v820, %v939
          %v941 = vpop.f32.mrb[0].mxu0
          %v942 = vpop.f32.mrb[0].mxu0
          %943 = vdwg.mxu0
          %v944 = vld [vmem:[#allocation6] sm:$0xff]
          %v945 = vmul.f32 %v940, 0.5
          %v946 = vmul.f32 %v945, 1.442695
          %v947 = vpow.pop %v946
          %v948 = vmul.f32 %v944, %v947
          %v949 = vadd.f32 %v938, %v948
          %v950 = vpack.c.bf16 %v949, %v949
          %v951 = vld [vmem:[#allocation10] sm:$0xf]
          %v952 = vld [vmem:[#allocation10 + $0x4] sm:$0xf]
          %v953 = vld [vmem:[#allocation10 + $0x8] sm:$0xf]
          %v954 = vld [vmem:[#allocation10 + $0xc] sm:$0xf]
          %v955 = vld [vmem:[#allocation10 + $0x10] sm:$0xf]
          %v956 = vld [vmem:[#allocation10 + $0x14] sm:$0xf]
          %v957 = vld [vmem:[#allocation10 + $0x18] sm:$0xf]
          %v958 = vld [vmem:[#allocation10 + $0x1c] sm:$0xf]
          %v959 = vld [vmem:[#allocation10 + $0x20] sm:$0xf]
          %v960 = vld [vmem:[#allocation10 + $0x24] sm:$0xf]
          %v961 = vld [vmem:[#allocation10 + $0x28] sm:$0xf]
          %v962 = vld [vmem:[#allocation10 + $0x2c] sm:$0xf]
          %v963 = vld [vmem:[#allocation10 + $0x30] sm:$0xf]
          %v964 = vld [vmem:[#allocation10 + $0x34] sm:$0xf]
          %v965 = vld [vmem:[#allocation10 + $0x38] sm:$0xf]
          %v966 = vld [vmem:[#allocation10 + $0x3c] sm:$0xf]
          %v967 = vld [vmem:[%s7] sm:$0x1]
          %v969 = vlaneseq
          %v970 = vshrl.u32 %v969, 7
          %v971 = vsub.s32 0, %v970
          %v972 = vrot.slane %v967, %v971
          %v990 = vunpack.c.l.b16 %v951
          %v991 = vunpack.c.l.b16 %v952
          %v992 = vunpack.c.l.b16 %v953
          %v993 = vunpack.c.l.b16 %v954
          %v994 = vunpack.c.l.b16 %v955
          %v995 = vunpack.c.l.b16 %v956
          %v996 = vunpack.c.l.b16 %v957
          %v997 = vunpack.c.l.b16 %v958
          %v998 = vunpack.c.l.b16 %v959
          %v999 = vunpack.c.l.b16 %v960
          %v1000 = vunpack.c.l.b16 %v961
          %v1001 = vunpack.c.l.b16 %v962
          %v1002 = vunpack.c.l.b16 %v963
          %v1003 = vunpack.c.l.b16 %v964
          %v1004 = vunpack.c.l.b16 %v965
          %v1005 = vunpack.c.l.b16 %v966
          %v1006 = vpack.c.b16 %v991, %v990
          %v1007 = vpack.c.b16 %v993, %v992
          %v1008 = vpack.c.b16 %v995, %v994
          %v1009 = vpack.c.b16 %v997, %v996
          %v1010 = vpack.c.b16 %v999, %v998
          %v1011 = vpack.c.b16 %v1001, %v1000
          %v1012 = vpack.c.b16 %v1003, %v1002
          %v1013 = vpack.c.b16 %v1005, %v1004
          %1022 = vmatprep.subr.bf16.mxu0 0
          %1023 = vmatpush1.bf16.msra.mxu0 %v1006
          %1024 = vmatprep.subr.bf16.mxu0 0
          %1025 = vmatpush1.bf16.msra.mxu0 %v1007
          %1026 = vmatprep.subr.bf16.mxu0 0
          %1027 = vmatpush1.bf16.msra.mxu0 %v1008
          %1028 = vmatprep.subr.bf16.mxu0 0
          %1029 = vmatpush1.bf16.msra.mxu0 %v1009
          %1030 = vmatprep.subr.bf16.mxu0 0
          %1031 = vmatpush1.bf16.msra.mxu0 %v1010
          %1032 = vmatprep.subr.bf16.mxu0 0
          %1033 = vmatpush1.bf16.msra.mxu0 %v1011
          %1034 = vmatprep.subr.bf16.mxu0 0
          %1035 = vmatpush1.bf16.msra.mxu0 %v1012
          %1036 = vmatprep.subr.bf16.mxu0 0
          %1037 = vmatpush1.bf16.msra.mxu0 %v1013
          %1038 = vmatprep.subr.bf16.mxu0 0
          %1039 = vmatpush1.bf16.msra.mxu0 0
          %1040 = vmatprep.subr.bf16.mxu0 0
          %1041 = vmatpush1.bf16.msra.mxu0 0
          %1042 = vmatprep.subr.bf16.mxu0 0
          %1043 = vmatpush1.bf16.msra.mxu0 0
          %1044 = vmatprep.subr.bf16.mxu0 0
          %1045 = vmatpush1.bf16.msra.mxu0 0
          %1046 = vmatprep.subr.bf16.mxu0 0
          %1047 = vmatpush1.bf16.msra.mxu0 0
          %1048 = vmatprep.subr.bf16.mxu0 0
          %1049 = vmatpush1.bf16.msra.mxu0 0
          %1050 = vmatprep.subr.bf16.mxu0 0
          %1051 = vmatpush1.bf16.msra.mxu0 0
          %1052 = vmatprep.subr.bf16.mxu0 0
          %1053 = vmatpush1.bf16.msra.mxu0 0
          %1054 = vmatprep.mubr.bf16.mxu0 0
          %1055 = vmatmul.mubr.bf16.gmra.mrb[0].mxu0 %v950
          %v1056 = vpop.f32.mrb[0].mxu0
          %v1057 = vadd.f32 %v972, %v1056
          %v1058 = vpop.f32.mrb[0].mxu0
          %v1059 = vpop.f32.mrb[0].mxu0
          %v1060 = vpop.f32.mrb[0].mxu0
          %1061 = vdwg.mxu0
          %v1062 = vmax.f32 %v1057, 0.0
          %v1063 = vpack.c.bf16 %v1062, %v1062
          %1064 = vst [vmem:[#allocation12] sm:$0xf] %v1063
        $region80: #{tpu_custom_call.1} parent=51 // pred_fallthru
          _
        // Predicated region
        $region81: #{tpu_custom_call.1} parent=51 // pred_check
          %p1065 = pneg %p240
        $region82: #{tpu_custom_call.1} parent=51 // pred_check_branch
          %1067 = sbr.rel (%p1065) target = $region84
        $region83: #{tpu_custom_call.1} parent=51 // pred_region
          %s1069 = ssub.s32 64, 64
          %1070 = vsyncadd [#allocation5], %s1069
          %s1071 = smul.addr %s29, 64
          %s1072 = scalar_lea.hbm %s8, %s1071
          %s1074 = sshll.u32 [#allocation12], 4
          %s1075 = int_to_ptr.vmem [resolvable:$true] %s1074
          %1077 = dma.vmem_to_hbm [thread:$0]  %s1075, 64, %s1072, [#allocation5]
        $region84: #{tpu_custom_call.1} parent=51 // pred_fallthru
          _
        // Predicated region
        $region85: #{tpu_custom_call.1} parent=51 // pred_check
          %p1078 = pneg %p240
        $region86: #{tpu_custom_call.1} parent=51 // pred_check_branch
          %1080 = sbr.rel (%p1078) target = $region88
        $region87: #{tpu_custom_call.1} parent=51 // pred_region
          %1081 = dma.done [#allocation5], 64
        $region88: #{tpu_custom_call.1} parent=51 // pred_fallthru
          _
      $region52: #{tpu_custom_call.1} parent=5 // pred_fallthru
        _
      %p1082 = scmp.le.s32.totalorder 2, %s20
      // Predicated region
      $region89: #{tpu_custom_call.1} parent=5 // pred_check
        %p1083 = pneg %p1082
      $region90: #{tpu_custom_call.1} parent=5 // pred_check_branch
        %1085 = sbr.rel (%p1083) target = $region92
      $region91: #{tpu_custom_call.1} parent=5 // pred_region
        %s1086 = ssub.s32 %s20, 2
      $region92: #{tpu_custom_call.1} parent=5 // pred_fallthru
        _
    $region6: #{tpu_custom_call.1} parent=1 // loop_footer
      %s24 = sadd.s32 1, %s20
    $region7: #{tpu_custom_call.1} parent=1 // loop_footer_branch
      %19 = sbr.rel target = $region3
    $region8: #{tpu_custom_call.1} parent=1 // loop_exit
      _
    %1087 = vsyncpa [#allocation4], 1
    %s1088 = scalar_lea.sflag [#allocation4], 1
    %1089 = vsyncpa %s1088, 1
    %1090 = vsyncpa [#allocation7], 1
    %1091 = vsyncpa [#allocation11], 1
    %1092 = vsyncpa [#allocation5], 1
    %s1093 = scalar_lea.sflag [#allocation5], 1
    %1094 = vsyncpa %s1093, 1

</llo_original>
